<compile_context>
chip_gen: v6e
topology: v6e:2x2x1
jax: 0.10.0
libtpu: 0.0.40
codegen_flags: <defaults>
</compile_context>

<pallas_src>
import jax
import jax.numpy as jnp
from jax.experimental import pallas as pl
from jax.experimental.pallas import tpu as pltpu


def reward_transformer_kernel(r_ref, w1_ref, b1_ref, w2_ref, b2_ref,
                              wv_ref, bv_ref, out_ref):
    """One (A, TILE_B) slab of transposed rewards; batch on lanes."""
    r = r_ref[...]                                                    # (A, TB)

    # attention MLP (transposed): h^T = W1^T @ r^T + b1 ; ReLU
    h = jnp.dot(w1_ref[...], r, preferred_element_type=jnp.float32) + b1_ref[...]
    h = jnp.maximum(h, 0.0)                                           # (H, TB)

    # logits^T = W2^T @ h^T + b2 ; softmax over the agent (sublane) axis
    logits = jnp.dot(w2_ref[...], h,
                     preferred_element_type=jnp.float32) + b2_ref[...]  # (A, TB)
    m = jnp.max(logits, axis=0, keepdims=True)                        # (1, TB)
    e = jnp.exp(logits - m)
    attn = e * pl.reciprocal(jnp.sum(e, axis=0, keepdims=True), approx=False)

    # weighted rewards + value head (reward_scale / reward_bias pre-folded)
    weighted = attn * r                                               # (A, TB)
    val = jnp.dot(wv_ref[...], weighted,
                  preferred_element_type=jnp.float32)                 # (1, TB)
    out_ref[...] = val + bv_ref[...]                                  # (1, TB)


def _round_up(x, m):
    return ((x + m - 1) // m) * m


def prepare_params(params):
    """One-time param transform: transpose to batch-on-lanes layout and fold
    reward_scale / reward_bias into the value head."""
    scale = params["reward_scale"][0]
    return {
        "w1_t": params["w1"].T,                                   # (H, A)
        "b1_t": params["b1"].T,                                   # (H, 1)
        "w2_t": params["w2"].T,                                   # (A, H)
        "b2_t": params["b2"].T,                                   # (A, 1)
        "wv_t": params["wv"].T * scale,                           # (1, A)
        "bv_f": params["bv"] * scale + params["reward_bias"],     # (1, 1)
    }


def reward_transformer_forward(rewards, prep, tile_b=8192):
    """rewards: (B, A) float32 -> (B,) float32 (matches torch .squeeze() for B>1)."""
    B, A = rewards.shape

    # Batch tiling: cap the tile, then pick the tile size that minimizes the
    # padded tail (<= one 128-lane tile of waste per grid step).
    tile_cap = max(128, min(tile_b, _round_up(B, 128)))
    n_tiles = -(-B // tile_cap)                       # ceil(B / tile_cap)
    tile_b = _round_up(-(-B // n_tiles), 128)         # lane-aligned per-tile size
    b_pad = n_tiles * tile_b

    r_t = rewards.T                                                   # (A, B)
    if b_pad != B:
        r_t = jnp.pad(r_t, ((0, 0), (0, b_pad - B)))  # zero lanes are harmless

    def const_spec(arr):
        # Small weights: DMA'd once, VMEM-resident across all grid steps.
        return pl.BlockSpec(arr.shape, lambda i: (0, 0))

    out = pl.pallas_call(
        reward_transformer_kernel,
        out_shape=jax.ShapeDtypeStruct((1, b_pad), jnp.float32),
        grid=(n_tiles,),
        in_specs=[
            pl.BlockSpec((A, tile_b), lambda i: (0, i)),              # rewards^T tile
            const_spec(prep["w1_t"]),
            const_spec(prep["b1_t"]),
            const_spec(prep["w2_t"]),
            const_spec(prep["b2_t"]),
            const_spec(prep["wv_t"]),
            const_spec(prep["bv_f"]),
        ],
        out_specs=pl.BlockSpec((1, tile_b), lambda i: (0, i)),        # lane-dense output
        compiler_params=pltpu.CompilerParams(
            dimension_semantics=("parallel",)),                       # megacore on v7x
    )(r_t, prep["w1_t"], prep["b1_t"], prep["w2_t"], prep["b2_t"],
      prep["wv_t"], prep["bv_f"])

    return out[0, :B]


def init_params(key, num_agents, hidden=64):
    """Deterministic init mimicking nn.Linear's U(-1/sqrt(fan_in), 1/sqrt(fan_in))."""
    ks = jax.random.split(key, 6)

    def lin(kw, kb, fan_in, fan_out):
        bound = 1.0 / jnp.sqrt(jnp.float32(fan_in))
        w = jax.random.uniform(kw, (fan_in, fan_out), jnp.float32, -bound, bound)
        b = jax.random.uniform(kb, (1, fan_out), jnp.float32, -bound, bound)
        return w, b

    w1, b1 = lin(ks[0], ks[1], num_agents, hidden)
    w2, b2 = lin(ks[2], ks[3], hidden, num_agents)
    wv, bv = lin(ks[4], ks[5], num_agents, 1)
    return {
        "w1": w1, "b1": b1,
        "w2": w2, "b2": b2,
        "wv": wv, "bv": bv,
        "reward_scale": jnp.ones((1,), jnp.float32),   # nn.Parameter(torch.ones(1))
        "reward_bias": jnp.zeros((1,), jnp.float32),   # nn.Parameter(torch.zeros(1))
    }


def reference_forward(rewards, p):
    """Pure-JAX reference of the PyTorch forward, for the correctness check."""
    h = jnp.maximum(rewards @ p["w1"] + p["b1"], 0.0)
    attn = jax.nn.softmax(h @ p["w2"] + p["b2"], axis=-1)
    weighted = attn * rewards
    val = (weighted @ p["wv"] + p["bv"])[:, 0]
    return val * p["reward_scale"][0] + p["reward_bias"][0]


if __name__ == "__main__":
    key = jax.random.PRNGKey(0)
    k_param, k_x = jax.random.split(key)

    batch, num_agents = 8, 4
    params = init_params(k_param, num_agents)
    rewards = jax.random.normal(k_x, (batch, num_agents), jnp.float32)

    prep = prepare_params(params)
    out = reward_transformer_forward(rewards, prep)
    jax.block_until_ready(out)

    ref = reference_forward(rewards, params)
    assert out.shape == (batch,)
    assert jnp.allclose(out, ref, atol=1e-5, rtol=1e-5)

    print("KERNEL_OK")
</pallas_src>

<mosaic_0001>
module attributes {stable_mosaic.version = 11 : i64} {
  func.func @reward_transformer_kernel(%arg0: i32, %arg1: memref<4x128xf32, #tpu.memory_space<vmem>>, %arg2: memref<64x4xf32, #tpu.memory_space<vmem>>, %arg3: memref<64x1xf32, #tpu.memory_space<vmem>>, %arg4: memref<4x64xf32, #tpu.memory_space<vmem>>, %arg5: memref<4x1xf32, #tpu.memory_space<vmem>>, %arg6: memref<1x4xf32, #tpu.memory_space<vmem>>, %arg7: memref<1x1xf32, #tpu.memory_space<vmem>>, %arg8: memref<1x128xf32, #tpu.memory_space<vmem>>) attributes {dimension_semantics = [#tpu.dimension_semantics<parallel>], iteration_bounds = array<i64: 1>, scalar_prefetch = 0 : i64, scratch_operands = 0 : i64, tpu.core_type = #tpu.core_type<tc>, window_params = [{transform_indices = @transform_0, window_bounds = array<i64: 4, 128>}, {pipeline_mode = #tpu.pipeline_mode<synchronous>, transform_indices = @transform_1, window_bounds = array<i64: 64, 4>}, {pipeline_mode = #tpu.pipeline_mode<synchronous>, transform_indices = @transform_2, window_bounds = array<i64: 64, 1>}, {pipeline_mode = #tpu.pipeline_mode<synchronous>, transform_indices = @transform_3, window_bounds = array<i64: 4, 64>}, {pipeline_mode = #tpu.pipeline_mode<synchronous>, transform_indices = @transform_4, window_bounds = array<i64: 4, 1>}, {pipeline_mode = #tpu.pipeline_mode<synchronous>, transform_indices = @transform_5, window_bounds = array<i64: 1, 4>}, {pipeline_mode = #tpu.pipeline_mode<synchronous>, transform_indices = @transform_6, window_bounds = array<i64: 1, 1>}, {transform_indices = @transform_7, window_bounds = array<i64: 1, 128>}]} {
    %c0 = arith.constant 0 : index
    %c0_0 = arith.constant 0 : index
    %0 = vector.load %arg1[%c0, %c0_0] : memref<4x128xf32, #tpu.memory_space<vmem>>, vector<4x128xf32>
    %c0_1 = arith.constant 0 : index
    %c0_2 = arith.constant 0 : index
    %1 = vector.load %arg2[%c0_1, %c0_2] : memref<64x4xf32, #tpu.memory_space<vmem>>, vector<64x4xf32>
    %cst = arith.constant dense<0.000000e+00> : vector<64x128xf32>
    %2 = tpu.matmul %1, %0, %cst {dimension_numbers = #tpu.dot_dimension_numbers<[1], [0], [0], [1], [0, 0, 1, 1], [], []>} : vector<64x4xf32>, vector<4x128xf32>, vector<64x128xf32> -> vector<64x128xf32>
    %c0_3 = arith.constant 0 : index
    %c0_4 = arith.constant 0 : index
    %3 = vector.load %arg3[%c0_3, %c0_4] : memref<64x1xf32, #tpu.memory_space<vmem>>, vector<64x1xf32>
    %4 = vector.broadcast %3 : vector<64x1xf32> to vector<64x128xf32>
    %5 = arith.addf %2, %4 : vector<64x128xf32>
    %cst_5 = arith.constant 0.000000e+00 : f32
    %6 = vector.broadcast %cst_5 : f32 to vector<64x128xf32>
    %7 = arith.maximumf %5, %6 : vector<64x128xf32>
    %c0_6 = arith.constant 0 : index
    %c0_7 = arith.constant 0 : index
    %8 = vector.load %arg4[%c0_6, %c0_7] : memref<4x64xf32, #tpu.memory_space<vmem>>, vector<4x64xf32>
    %cst_8 = arith.constant dense<0.000000e+00> : vector<4x128xf32>
    %9 = tpu.matmul %8, %7, %cst_8 {dimension_numbers = #tpu.dot_dimension_numbers<[1], [0], [0], [1], [0, 0, 1, 1], [], []>} : vector<4x64xf32>, vector<64x128xf32>, vector<4x128xf32> -> vector<4x128xf32>
    %c0_9 = arith.constant 0 : index
    %c0_10 = arith.constant 0 : index
    %10 = vector.load %arg5[%c0_9, %c0_10] : memref<4x1xf32, #tpu.memory_space<vmem>>, vector<4x1xf32>
    %11 = vector.broadcast %10 : vector<4x1xf32> to vector<4x128xf32>
    %12 = arith.addf %9, %11 : vector<4x128xf32>
    %cst_11 = arith.constant dense<0xFF800000> : vector<128xf32>
    %13 = vector.multi_reduction <maximumf>, %12, %cst_11 [0] : vector<4x128xf32> to vector<128xf32>
    %14 = vector.shape_cast %13 : vector<128xf32> to vector<1x128xf32>
    %15 = vector.broadcast %14 : vector<1x128xf32> to vector<4x128xf32>
    %16 = arith.subf %12, %15 : vector<4x128xf32>
    %17 = math.exp %16 : vector<4x128xf32>
    %cst_12 = arith.constant dense<0.000000e+00> : vector<128xf32>
    %18 = vector.multi_reduction <add>, %17, %cst_12 [0] : vector<4x128xf32> to vector<128xf32>
    %19 = vector.shape_cast %18 : vector<128xf32> to vector<1x128xf32>
    %20 = tpu.reciprocal %19 : vector<1x128xf32> -> vector<1x128xf32>
    %21 = vector.broadcast %20 : vector<1x128xf32> to vector<4x128xf32>
    %22 = arith.mulf %17, %21 : vector<4x128xf32>
    %23 = arith.mulf %22, %0 : vector<4x128xf32>
    %c0_13 = arith.constant 0 : index
    %c0_14 = arith.constant 0 : index
    %24 = vector.load %arg6[%c0_13, %c0_14] : memref<1x4xf32, #tpu.memory_space<vmem>>, vector<1x4xf32>
    %cst_15 = arith.constant dense<0.000000e+00> : vector<1x128xf32>
    %25 = tpu.matmul %24, %23, %cst_15 {dimension_numbers = #tpu.dot_dimension_numbers<[1], [0], [0], [1], [0, 0, 1, 1], [], []>} : vector<1x4xf32>, vector<4x128xf32>, vector<1x128xf32> -> vector<1x128xf32>
    %c0_16 = arith.constant 0 : index
    %c0_17 = arith.constant 0 : index
    %26 = vector.load %arg7[%c0_16, %c0_17] : memref<1x1xf32, #tpu.memory_space<vmem>>, vector<1x1xf32>
    %27 = vector.broadcast %26 : vector<1x1xf32> to vector<1x128xf32>
    %28 = arith.addf %25, %27 : vector<1x128xf32>
    %c0_18 = arith.constant 0 : index
    %c0_19 = arith.constant 0 : index
    %29 = vector.load %arg8[%c0_18, %c0_19] : memref<1x128xf32, #tpu.memory_space<vmem>>, vector<1x128xf32>
    tpu.vector_store %arg8[%c0_18, %c0_19], %28 {strides = array<i32>} : memref<1x128xf32, #tpu.memory_space<vmem>>, vector<1x128xf32>,
    return
  }
  func.func @transform_0(%arg0: i32) -> (i32, i32) {
    %c0_i32 = arith.constant 0 : i32
    %c0_i32_0 = arith.constant 0 : i32
    return %c0_i32, %arg0 : i32, i32
  }
  func.func @transform_1(%arg0: i32) -> (i32, i32) {
    %c0_i32 = arith.constant 0 : i32
    %c0_i32_0 = arith.constant 0 : i32
    %c0_i32_1 = arith.constant 0 : i32
    return %c0_i32, %c0_i32_0 : i32, i32
  }
  func.func @transform_2(%arg0: i32) -> (i32, i32) {
    %c0_i32 = arith.constant 0 : i32
    %c0_i32_0 = arith.constant 0 : i32
    %c0_i32_1 = arith.constant 0 : i32
    return %c0_i32, %c0_i32_0 : i32, i32
  }
  func.func @transform_3(%arg0: i32) -> (i32, i32) {
    %c0_i32 = arith.constant 0 : i32
    %c0_i32_0 = arith.constant 0 : i32
    %c0_i32_1 = arith.constant 0 : i32
    return %c0_i32, %c0_i32_0 : i32, i32
  }
  func.func @transform_4(%arg0: i32) -> (i32, i32) {
    %c0_i32 = arith.constant 0 : i32
    %c0_i32_0 = arith.constant 0 : i32
    %c0_i32_1 = arith.constant 0 : i32
    return %c0_i32, %c0_i32_0 : i32, i32
  }
  func.func @transform_5(%arg0: i32) -> (i32, i32) {
    %c0_i32 = arith.constant 0 : i32
    %c0_i32_0 = arith.constant 0 : i32
    %c0_i32_1 = arith.constant 0 : i32
    return %c0_i32, %c0_i32_0 : i32, i32
  }
  func.func @transform_6(%arg0: i32) -> (i32, i32) {
    %c0_i32 = arith.constant 0 : i32
    %c0_i32_0 = arith.constant 0 : i32
    %c0_i32_1 = arith.constant 0 : i32
    return %c0_i32, %c0_i32_0 : i32, i32
  }
  func.func @transform_7(%arg0: i32) -> (i32, i32) {
    %c0_i32 = arith.constant 0 : i32
    %c0_i32_0 = arith.constant 0 : i32
    return %c0_i32, %arg0 : i32, i32
  }
}

</mosaic_0001>

<llo_original>
// kernel: tpu_custom_call.1
$region0: #{tpu_custom_call.1}
  #allocation0 [shape = 'u32[]', space=smem, size = 0x4, offset = 0x4, fixed_abs, tag = 'smem constant byte address 0x4 - core index']
  #allocation1 [shape = 'u32[144,128]{1,0:T(1,128)}', space=vmem, size = 0x12000, scoped, tag = 'internal scratch']
  #allocation2 [shape = 'f32[1,1]{1,0:T(1,128)S(1)}', space=vmem, size = 0x200, scoped, tag = 'scoped memory for tpu_custom_call.1']
  %s0 = inlined_call_operand.vmem [shape: f32[4,128], index: 0, kind: input, shape index: {}]
  %s1 = inlined_call_operand.vmem [shape: f32[64,4], index: 1, kind: input, shape index: {}]
  %s2 = inlined_call_operand.vmem [shape: f32[64,1], index: 2, kind: input, shape index: {}]
  %s3 = inlined_call_operand.vmem [shape: f32[4,64], index: 3, kind: input, shape index: {}]
  %s4 = inlined_call_operand.vmem [shape: f32[4,1], index: 4, kind: input, shape index: {}]
  %s5 = inlined_call_operand.vmem [shape: f32[1,4], index: 5, kind: input, shape index: {}]
  %s6 = inlined_call_operand.<no memory space> [shape: f32[1,1], index: 6, kind: input, shape index: {}]
  %s7 = inlined_call_operand.hbm [shape: f32[1,128], index: 7, kind: output, shape index: {}]
  %s8 = sld [smem:[#allocation0]]
  $region38: #{tpu_custom_call.1} parent=0
    _
  %s10 = ssub.s32 1, %s8
  %s11 = scalar_select 0, %s10, %s8
  %v12 = vstv %s6
  %13 = vst [vmem:[#allocation2] sm:$0x1] %v12
  $region1: #{tpu_custom_call.1} parent=0
    #allocation3 [shape = 'u8[512]{0}', space=vmem, size = 0x400, scoped, tag = 'output window, operand 0, single buffered']
    #allocation4 [shape = 's32[1]{0}', space=sflag, size = 0x4, scoped, tag = 'scoped memory for tpu_custom_call.1']
    %14 = vsyncpa [#allocation4], 0
    // Predicated region
    $region2: #{tpu_custom_call.1} parent=1 // pred_check
      _
    $region3: #{tpu_custom_call.1} parent=1 // pred_check_branch
      %16 = sbr.rel (0) target = $region5
    $region4: #{tpu_custom_call.1} parent=1 // pred_region
      _
    $region5: #{tpu_custom_call.1} parent=1 // pred_fallthru
      _
    // Predicated region
    $region6: #{tpu_custom_call.1} parent=1 // pred_check
      _
    $region7: #{tpu_custom_call.1} parent=1 // pred_check_branch
      %18 = sbr.rel (0) target = $region9
    $region8: #{tpu_custom_call.1} parent=1 // pred_region
      _
    $region9: #{tpu_custom_call.1} parent=1 // pred_fallthru
      _
    // Predicated region
    $region10: #{tpu_custom_call.1} parent=1 // pred_check
      _
    $region11: #{tpu_custom_call.1} parent=1 // pred_check_branch
      %20 = sbr.rel (0) target = $region13
    $region12: #{tpu_custom_call.1} parent=1 // pred_region
      _
    $region13: #{tpu_custom_call.1} parent=1 // pred_fallthru
      _
    // Predicated region
    $region14: #{tpu_custom_call.1} parent=1 // pred_check
      _
    $region15: #{tpu_custom_call.1} parent=1 // pred_check_branch
      %22 = sbr.rel (0) target = $region17
    $region16: #{tpu_custom_call.1} parent=1 // pred_region
      _
    $region17: #{tpu_custom_call.1} parent=1 // pred_fallthru
      _
    // Predicated region
    $region18: #{tpu_custom_call.1} parent=1 // pred_check
      _
    $region19: #{tpu_custom_call.1} parent=1 // pred_check_branch
      %24 = sbr.rel (0) target = $region21
    $region20: #{tpu_custom_call.1} parent=1 // pred_region
      _
    $region21: #{tpu_custom_call.1} parent=1 // pred_fallthru
      _
    // Predicated region
    $region22: #{tpu_custom_call.1} parent=1 // pred_check
      _
    $region23: #{tpu_custom_call.1} parent=1 // pred_check_branch
      %26 = sbr.rel (0) target = $region25
    $region24: #{tpu_custom_call.1} parent=1 // pred_region
      _
    $region25: #{tpu_custom_call.1} parent=1 // pred_fallthru
      _
    // Predicated region
    $region26: #{tpu_custom_call.1} parent=1 // pred_check
      _
    $region27: #{tpu_custom_call.1} parent=1 // pred_check_branch
      %28 = sbr.rel (0) target = $region29
    $region28: #{tpu_custom_call.1} parent=1 // pred_region
      _
    $region29: #{tpu_custom_call.1} parent=1 // pred_fallthru
      _
    %v29 = vld [vmem:[%s0] sm:$0xf]
    %v30 = vld [vmem:[%s1] sm:$0xff]
    %v31 = vld [vmem:[%s1 + $0x8] sm:$0xff]
    %v32 = vld [vmem:[%s1 + $0x10] sm:$0xff]
    %v33 = vld [vmem:[%s1 + $0x18] sm:$0xff]
    %v34 = vld [vmem:[%s1 + $0x20] sm:$0xff]
    %v35 = vld [vmem:[%s1 + $0x28] sm:$0xff]
    %v36 = vld [vmem:[%s1 + $0x30] sm:$0xff]
    %v37 = vld [vmem:[%s1 + $0x38] sm:$0xff]
    %v38 = vld [vmem:[%s2] sm:$0xff]
    %v39 = vld [vmem:[%s2 + $0x8] sm:$0xff]
    %v40 = vld [vmem:[%s2 + $0x10] sm:$0xff]
    %v41 = vld [vmem:[%s2 + $0x18] sm:$0xff]
    %v42 = vld [vmem:[%s2 + $0x20] sm:$0xff]
    %v43 = vld [vmem:[%s2 + $0x28] sm:$0xff]
    %v44 = vld [vmem:[%s2 + $0x30] sm:$0xff]
    %v45 = vld [vmem:[%s2 + $0x38] sm:$0xff]
    %47 = vset.pattern.permute.xlu0 0
    %48 = vperm.xlu0 %47, %v38
    %v49 = vpop.permute.xlu0 %48
    %52 = vset.pattern.permute.xlu0 0
    %53 = vperm.xlu0 %52, %v39
    %v54 = vpop.permute.xlu0 %53
    %57 = vset.pattern.permute.xlu0 0
    %58 = vperm.xlu0 %57, %v40
    %v59 = vpop.permute.xlu0 %58
    %62 = vset.pattern.permute.xlu0 0
    %63 = vperm.xlu0 %62, %v41
    %v64 = vpop.permute.xlu0 %63
    %67 = vset.pattern.permute.xlu0 0
    %68 = vperm.xlu0 %67, %v42
    %v69 = vpop.permute.xlu0 %68
    %72 = vset.pattern.permute.xlu0 0
    %73 = vperm.xlu0 %72, %v43
    %v74 = vpop.permute.xlu0 %73
    %77 = vset.pattern.permute.xlu0 0
    %78 = vperm.xlu0 %77, %v44
    %v79 = vpop.permute.xlu0 %78
    %82 = vset.pattern.permute.xlu0 0
    %83 = vperm.xlu0 %82, %v45
    %v84 = vpop.permute.xlu0 %83
    %vm86 = vcmask 31744
    %v88 = vsel %vm86, %v30, 0
    %v91 = vsel %vm86, %v31, 0
    %v94 = vsel %vm86, %v32, 0
    %v97 = vsel %vm86, %v33, 0
    %v100 = vsel %vm86, %v34, 0
    %v103 = vsel %vm86, %v35, 0
    %v106 = vsel %vm86, %v36, 0
    %v109 = vsel %vm86, %v37, 0
    %vm111 = vcmask 1043456
    %v113 = vsel %vm111, %v29, 0
    %115 = vmatprep.subr.mxu0 0.0
    %116 = vmatpush1.msra.mxu0 0.0
    %117 = vmatprep.subr.mxu0 0.0
    %118 = vmatpush1.msra.mxu0 0.0
    %119 = vmatprep.subr.mxu0 0.0
    %120 = vmatpush1.msra.mxu0 0.0
    %121 = vmatprep.subr.mxu0 0.0
    %122 = vmatpush1.msra.mxu0 0.0
    %123 = vmatprep.subr.mxu0 0.0
    %124 = vmatpush1.msra.mxu0 0.0
    %125 = vmatprep.subr.mxu0 0.0
    %126 = vmatpush1.msra.mxu0 0.0
    %127 = vmatprep.subr.mxu0 0.0
    %128 = vmatpush1.msra.mxu0 0.0
    %129 = vmatprep.subr.mxu0 0.0
    %130 = vmatpush1.msra.mxu0 0.0
    %131 = vmatprep.subr.mxu0 0.0
    %132 = vmatpush1.msra.mxu0 0.0
    %133 = vmatprep.subr.mxu0 0.0
    %134 = vmatpush1.msra.mxu0 0.0
    %135 = vmatprep.subr.mxu0 0.0
    %136 = vmatpush1.msra.mxu0 0.0
    %137 = vmatprep.subr.mxu0 0.0
    %138 = vmatpush1.msra.mxu0 0.0
    %139 = vmatprep.subr.mxu0 0.0
    %140 = vmatpush1.msra.mxu0 0.0
    %141 = vmatprep.subr.mxu0 0.0
    %142 = vmatpush1.msra.mxu0 0.0
    %143 = vmatprep.subr.mxu0 0.0
    %144 = vmatpush1.msra.mxu0 0.0
    %145 = vmatprep.subr.mxu0 0.0
    %146 = vmatpush1.msra.mxu0 %v113
    %147 = vmatprep.subr.mxu0 0.0
    %148 = vmatpush2.msra.mxu0 0.0
    %149 = vmatprep.subr.mxu0 0.0
    %150 = vmatpush2.msra.mxu0 0.0
    %151 = vmatprep.subr.mxu0 0.0
    %152 = vmatpush2.msra.mxu0 0.0
    %153 = vmatprep.subr.mxu0 0.0
    %154 = vmatpush2.msra.mxu0 0.0
    %155 = vmatprep.subr.mxu0 0.0
    %156 = vmatpush2.msra.mxu0 0.0
    %157 = vmatprep.subr.mxu0 0.0
    %158 = vmatpush2.msra.mxu0 0.0
    %159 = vmatprep.subr.mxu0 0.0
    %160 = vmatpush2.msra.mxu0 0.0
    %161 = vmatprep.subr.mxu0 0.0
    %162 = vmatpush2.msra.mxu0 0.0
    %163 = vmatprep.subr.mxu0 0.0
    %164 = vmatpush2.msra.mxu0 0.0
    %165 = vmatprep.subr.mxu0 0.0
    %166 = vmatpush2.msra.mxu0 0.0
    %167 = vmatprep.subr.mxu0 0.0
    %168 = vmatpush2.msra.mxu0 0.0
    %169 = vmatprep.subr.mxu0 0.0
    %170 = vmatpush2.msra.mxu0 0.0
    %171 = vmatprep.subr.mxu0 0.0
    %172 = vmatpush2.msra.mxu0 0.0
    %173 = vmatprep.subr.mxu0 0.0
    %174 = vmatpush2.msra.mxu0 0.0
    %175 = vmatprep.subr.mxu0 0.0
    %176 = vmatpush2.msra.mxu0 0.0
    %177 = vmatprep.subr.mxu0 0.0
    %178 = vmatpush2.msra.mxu0 0.0
    %179 = vmatprep.mubr.f32.mxu0 0.0
    %180 = vmatmul.mubr.f32.gmra.mxu0 %v88
    %v181 = vpop.f32.mrf.mxu0
    %v182 = vadd.f32 %v49, %v181
    %v183 = vpop.f32.mrf.mxu0
    %184 = vmatprep.mubr.f32.mxu0 0.0
    %185 = vmatmul.mubr.f32.gmra.mxu0 %v91
    %v186 = vpop.f32.mrf.mxu0
    %v187 = vadd.f32 %v54, %v186
    %v188 = vpop.f32.mrf.mxu0
    %189 = vmatprep.mubr.f32.mxu0 0.0
    %190 = vmatmul.mubr.f32.gmra.mxu0 %v94
    %v191 = vpop.f32.mrf.mxu0
    %v192 = vadd.f32 %v59, %v191
    %v193 = vpop.f32.mrf.mxu0
    %194 = vmatprep.mubr.f32.mxu0 0.0
    %195 = vmatmul.mubr.f32.gmra.mxu0 %v97
    %v196 = vpop.f32.mrf.mxu0
    %v197 = vadd.f32 %v64, %v196
    %v198 = vpop.f32.mrf.mxu0
    %199 = vmatprep.mubr.f32.mxu0 0.0
    %200 = vmatmul.mubr.f32.gmra.mxu0 %v100
    %v201 = vpop.f32.mrf.mxu0
    %v202 = vadd.f32 %v69, %v201
    %v203 = vpop.f32.mrf.mxu0
    %204 = vmatprep.mubr.f32.mxu0 0.0
    %205 = vmatmul.mubr.f32.gmra.mxu0 %v103
    %v206 = vpop.f32.mrf.mxu0
    %v207 = vadd.f32 %v74, %v206
    %v208 = vpop.f32.mrf.mxu0
    %209 = vmatprep.mubr.f32.mxu0 0.0
    %210 = vmatmul.mubr.f32.gmra.mxu0 %v106
    %v211 = vpop.f32.mrf.mxu0
    %v212 = vadd.f32 %v79, %v211
    %v213 = vpop.f32.mrf.mxu0
    %214 = vmatprep.mubr.f32.mxu0 0.0
    %215 = vmatmul.mubr.f32.gmra.mxu0 %v109
    %v216 = vpop.f32.mrf.mxu0
    %v217 = vadd.f32 %v84, %v216
    %v218 = vpop.f32.mrf.mxu0
    %219 = vdwg.mxu0
    %v220 = vmax.f32 %v182, 0.0
    %v221 = vmax.f32 %v187, 0.0
    %v222 = vmax.f32 %v192, 0.0
    %v223 = vmax.f32 %v197, 0.0
    %v224 = vmax.f32 %v202, 0.0
    %v225 = vmax.f32 %v207, 0.0
    %v226 = vmax.f32 %v212, 0.0
    %v227 = vmax.f32 %v217, 0.0
    %v228 = vld [vmem:[%s3] sm:$0xf]
    %v229 = vld [vmem:[%s4] sm:$0xf]
    %231 = vset.pattern.permute.xlu0 0
    %232 = vperm.xlu0 %231, %v229
    %v233 = vpop.permute.xlu0 %232
    %vm235 = vcmask 523264
    %v237 = vsel %vm235, %v228, 0
    %239 = vmatprep.subr.mxu0 0.0
    %240 = vmatpush1.msra.mxu0 0.0
    %241 = vmatprep.subr.mxu0 0.0
    %242 = vmatpush1.msra.mxu0 0.0
    %243 = vmatprep.subr.mxu0 0.0
    %244 = vmatpush1.msra.mxu0 0.0
    %245 = vmatprep.subr.mxu0 0.0
    %246 = vmatpush1.msra.mxu0 0.0
    %247 = vmatprep.subr.mxu0 0.0
    %248 = vmatpush1.msra.mxu0 0.0
    %249 = vmatprep.subr.mxu0 0.0
    %250 = vmatpush1.msra.mxu0 0.0
    %251 = vmatprep.subr.mxu0 0.0
    %252 = vmatpush1.msra.mxu0 0.0
    %253 = vmatprep.subr.mxu0 0.0
    %254 = vmatpush1.msra.mxu0 0.0
    %255 = vmatprep.subr.mxu0 0.0
    %256 = vmatpush1.msra.mxu0 %v227
    %257 = vmatprep.subr.mxu0 0.0
    %258 = vmatpush1.msra.mxu0 %v226
    %259 = vmatprep.subr.mxu0 0.0
    %260 = vmatpush1.msra.mxu0 %v225
    %261 = vmatprep.subr.mxu0 0.0
    %262 = vmatpush1.msra.mxu0 %v224
    %263 = vmatprep.subr.mxu0 0.0
    %264 = vmatpush1.msra.mxu0 %v223
    %265 = vmatprep.subr.mxu0 0.0
    %266 = vmatpush1.msra.mxu0 %v222
    %267 = vmatprep.subr.mxu0 0.0
    %268 = vmatpush1.msra.mxu0 %v221
    %269 = vmatprep.subr.mxu0 0.0
    %270 = vmatpush1.msra.mxu0 %v220
    %271 = vmatprep.subr.mxu0 0.0
    %272 = vmatpush2.msra.mxu0 0.0
    %273 = vmatprep.subr.mxu0 0.0
    %274 = vmatpush2.msra.mxu0 0.0
    %275 = vmatprep.subr.mxu0 0.0
    %276 = vmatpush2.msra.mxu0 0.0
    %277 = vmatprep.subr.mxu0 0.0
    %278 = vmatpush2.msra.mxu0 0.0
    %279 = vmatprep.subr.mxu0 0.0
    %280 = vmatpush2.msra.mxu0 0.0
    %281 = vmatprep.subr.mxu0 0.0
    %282 = vmatpush2.msra.mxu0 0.0
    %283 = vmatprep.subr.mxu0 0.0
    %284 = vmatpush2.msra.mxu0 0.0
    %285 = vmatprep.subr.mxu0 0.0
    %286 = vmatpush2.msra.mxu0 0.0
    %287 = vmatprep.subr.mxu0 0.0
    %288 = vmatpush2.msra.mxu0 0.0
    %289 = vmatprep.subr.mxu0 0.0
    %290 = vmatpush2.msra.mxu0 0.0
    %291 = vmatprep.subr.mxu0 0.0
    %292 = vmatpush2.msra.mxu0 0.0
    %293 = vmatprep.subr.mxu0 0.0
    %294 = vmatpush2.msra.mxu0 0.0
    %295 = vmatprep.subr.mxu0 0.0
    %296 = vmatpush2.msra.mxu0 0.0
    %297 = vmatprep.subr.mxu0 0.0
    %298 = vmatpush2.msra.mxu0 0.0
    %299 = vmatprep.subr.mxu0 0.0
    %300 = vmatpush2.msra.mxu0 0.0
    %301 = vmatprep.subr.mxu0 0.0
    %302 = vmatpush2.msra.mxu0 0.0
    %303 = vmatprep.mubr.f32.mxu0 0.0
    %304 = vmatmul.mubr.f32.gmra.mxu0 %v237
    %v305 = vpop.f32.mrf.mxu0
    %v306 = vadd.f32 %v233, %v305
    %v307 = vpop.f32.mrf.mxu0
    %308 = vdwg.mxu0
    %v309 = vsel %vm111, %v306, -inf
    %v310 = vrot.slane %v309, 4
    %v311 = vmax.f32 %v309, %v310
    %v312 = vrot.slane %v311, 2
    %v313 = vmax.f32 %v311, %v312
    %v314 = vrot.slane %v313, 1
    %v315 = vmax.f32 %v313, %v314
    %v316 = vsub.f32 %v306, %v315
    %v317 = vmul.f32 %v316, 1.442695
    %v318 = vpow.pop %v317
    %v319 = vsel %vm111, %v318, 0.0
    %v320 = vrot.slane %v319, 4
    %v321 = vadd.f32 %v319, %v320
    %v322 = vrot.slane %v321, 2
    %v323 = vadd.f32 %v321, %v322
    %v324 = vrot.slane %v323, 1
    %v325 = vadd.f32 %v323, %v324
    %v326 = vrcp.pop %v325
    %v327 = vmul.f32 %v318, %v326
    %v328 = vmul.f32 %v327, %v29
    %v329 = vld [vmem:[%s5] sm:$0x1]
    %v330 = vld [vmem:[#allocation2] sm:$0x1]
    %332 = vset.pattern.permute.xlu0 0
    %333 = vperm.xlu0 %332, %v330
    %v334 = vpop.permute.xlu0 %333
    %v336 = vlaneseq
    %v337 = vshrl.u32 %v336, 7
    %v338 = vsub.s32 0, %v337
    %v339 = vrot.slane %v334, %v338
    %v341 = vsel %vm86, %v329, 0
    %v344 = vsel %vm111, %v328, 0
    %346 = vmatprep.subr.mxu0 0.0
    %347 = vmatpush1.msra.mxu0 0.0
    %348 = vmatprep.subr.mxu0 0.0
    %349 = vmatpush1.msra.mxu0 0.0
    %350 = vmatprep.subr.mxu0 0.0
    %351 = vmatpush1.msra.mxu0 0.0
    %352 = vmatprep.subr.mxu0 0.0
    %353 = vmatpush1.msra.mxu0 0.0
    %354 = vmatprep.subr.mxu0 0.0
    %355 = vmatpush1.msra.mxu0 0.0
    %356 = vmatprep.subr.mxu0 0.0
    %357 = vmatpush1.msra.mxu0 0.0
    %358 = vmatprep.subr.mxu0 0.0
    %359 = vmatpush1.msra.mxu0 0.0
    %360 = vmatprep.subr.mxu0 0.0
    %361 = vmatpush1.msra.mxu0 0.0
    %362 = vmatprep.subr.mxu0 0.0
    %363 = vmatpush1.msra.mxu0 0.0
    %364 = vmatprep.subr.mxu0 0.0
    %365 = vmatpush1.msra.mxu0 0.0
    %366 = vmatprep.subr.mxu0 0.0
    %367 = vmatpush1.msra.mxu0 0.0
    %368 = vmatprep.subr.mxu0 0.0
    %369 = vmatpush1.msra.mxu0 0.0
    %370 = vmatprep.subr.mxu0 0.0
    %371 = vmatpush1.msra.mxu0 0.0
    %372 = vmatprep.subr.mxu0 0.0
    %373 = vmatpush1.msra.mxu0 0.0
    %374 = vmatprep.subr.mxu0 0.0
    %375 = vmatpush1.msra.mxu0 0.0
    %376 = vmatprep.subr.mxu0 0.0
    %377 = vmatpush1.msra.mxu0 %v344
    %378 = vmatprep.subr.mxu0 0.0
    %379 = vmatpush2.msra.mxu0 0.0
    %380 = vmatprep.subr.mxu0 0.0
    %381 = vmatpush2.msra.mxu0 0.0
    %382 = vmatprep.subr.mxu0 0.0
    %383 = vmatpush2.msra.mxu0 0.0
    %384 = vmatprep.subr.mxu0 0.0
    %385 = vmatpush2.msra.mxu0 0.0
    %386 = vmatprep.subr.mxu0 0.0
    %387 = vmatpush2.msra.mxu0 0.0
    %388 = vmatprep.subr.mxu0 0.0
    %389 = vmatpush2.msra.mxu0 0.0
    %390 = vmatprep.subr.mxu0 0.0
    %391 = vmatpush2.msra.mxu0 0.0
    %392 = vmatprep.subr.mxu0 0.0
    %393 = vmatpush2.msra.mxu0 0.0
    %394 = vmatprep.subr.mxu0 0.0
    %395 = vmatpush2.msra.mxu0 0.0
    %396 = vmatprep.subr.mxu0 0.0
    %397 = vmatpush2.msra.mxu0 0.0
    %398 = vmatprep.subr.mxu0 0.0
    %399 = vmatpush2.msra.mxu0 0.0
    %400 = vmatprep.subr.mxu0 0.0
    %401 = vmatpush2.msra.mxu0 0.0
    %402 = vmatprep.subr.mxu0 0.0
    %403 = vmatpush2.msra.mxu0 0.0
    %404 = vmatprep.subr.mxu0 0.0
    %405 = vmatpush2.msra.mxu0 0.0
    %406 = vmatprep.subr.mxu0 0.0
    %407 = vmatpush2.msra.mxu0 0.0
    %408 = vmatprep.subr.mxu0 0.0
    %409 = vmatpush2.msra.mxu0 0.0
    %410 = vmatprep.mubr.f32.mxu0 0.0
    %411 = vmatmul.mubr.f32.gmra.mxu0 %v341
    %v412 = vpop.f32.mrf.mxu0
    %v413 = vadd.f32 %v339, %v412
    %v414 = vpop.f32.mrf.mxu0
    %415 = vdwg.mxu0
    %416 = vst [vmem:[#allocation3] sm:$0x1] %v413
    // Predicated region
    $region30: #{tpu_custom_call.1} parent=1 // pred_check
      _
    $region31: #{tpu_custom_call.1} parent=1 // pred_check_branch
      %418 = sbr.rel (0) target = $region33
    $region32: #{tpu_custom_call.1} parent=1 // pred_region
      %s420 = ssub.s32 16, 16
      %421 = vsyncadd [#allocation4], %s420
      %s423 = sshll.u32 [#allocation3], 4
      %s424 = int_to_ptr.vmem [resolvable:$true] %s423
      %426 = dma.vmem_to_hbm [thread:$0]  %s424, 16, %s7, [#allocation4]
    $region33: #{tpu_custom_call.1} parent=1 // pred_fallthru
      _
    // Predicated region
    $region34: #{tpu_custom_call.1} parent=1 // pred_check
      _
    $region35: #{tpu_custom_call.1} parent=1 // pred_check_branch
      %428 = sbr.rel (0) target = $region37
    $region36: #{tpu_custom_call.1} parent=1 // pred_region
      %429 = dma.done [#allocation4], 16
    $region37: #{tpu_custom_call.1} parent=1 // pred_fallthru
      _
    %430 = vsyncpa [#allocation4], 1

</llo_original>
